<compile_context>
chip_gen: v7x
topology: tpu7x:2x2x1
jax: 0.10.0
libtpu: 0.0.40
codegen_flags: <defaults>
</compile_context>

<pallas_src>
import functools
import math

import jax
import jax.numpy as jnp
from jax import lax
from jax.experimental import pallas as pl
from jax.experimental.pallas import tpu as pltpu


def cls_attn_kernel(x_ref, k_ref, cq_ref, p_ref, o_ref, *, num_groups, hw):
    """One grid step = B_TILE batch samples, fully fused clsAttn_Linear body.

    x_ref  : (B, C, HWp)  input block (also the residual source); HWp == hw,
                          or hw rounded up to a multiple of 128 (zero padded).
    k_ref  : (B, C, 1)    elu(Q_emb(cls)) + 1           ("K" in the reference)
    cq_ref : (B, C, 1)    conv_w @ ((elu(K_emb(cls)) + 1) / sqrt(C))
    p_ref  : (C, 8)       packed per-channel params
                          [ln_w, ln_b, gn_w, gn_b, conv_b, 0, 0, 0]
    o_ref  : (B, C, HWp)
    """
    B, C, HWp = x_ref.shape
    cpg = C // num_groups
    inv_cnt = 1.0 / float(cpg * hw)
    eps = 1e-5
    fhw = float(hw)

    x = x_ref[...].astype(jnp.float32)

    ln_w = p_ref[:, 0:1]
    ln_b = p_ref[:, 1:2]
    gn_w = p_ref[:, 2:3]
    gn_b = p_ref[:, 3:4]
    cb = p_ref[:, 4:5]
    k = k_ref[...].astype(jnp.float32)                           # (B, C, 1)
    cq = cq_ref[...].astype(jnp.float32)                         # (B, C, 1)

    def gsum(v):            # (B, C, 1) -> (B, G, 1, 1) per-group channel sums
        return jnp.sum(v.reshape(B, num_groups, cpg, 1), axis=2, keepdims=True)

    def bcast_c(v):         # (B, G, 1, 1) -> (B, C, 1)
        return jnp.broadcast_to(v, (B, num_groups, cpg, 1)).reshape(B, C, 1)

    # ---- GN1 stats: single pass (sum, sum-of-squares) over lanes, then tiny
    #      group combine. Zero lane-padding contributes 0 to both sums.
    cs1 = jnp.sum(x, axis=-1, keepdims=True)                     # (B, C, 1)
    cs2 = jnp.sum(x * x, axis=-1, keepdims=True)                 # (B, C, 1)
    mean1 = gsum(cs1) * inv_cnt                                  # (B, G, 1, 1)
    var1 = gsum(cs2) * inv_cnt - mean1 * mean1
    inv1 = bcast_c(lax.rsqrt(var1 + eps))                        # (B, C, 1)
    mean1c = bcast_c(mean1)                                      # (B, C, 1)

    # ---- Fold GN1 affine + K channel reduction (xn never materialized):
    #      s(hw) = sum_c k_c * xn_c(hw) = sum_c a_c * x_c(hw) + const
    a = k * ln_w * inv1                                          # (B, C, 1)
    const = jnp.sum(k * (ln_b - ln_w * inv1 * mean1c),
                    axis=1, keepdims=True)                       # (B, 1, 1)
    sw = jnp.sum(x * a, axis=1, keepdims=True)                   # (B, 1, HWp)

    # lane stats of the true s = sw + const over the hw real lanes
    s1r = jnp.sum(sw, axis=-1, keepdims=True)                    # (B, 1, 1)
    s2r = jnp.sum(sw * sw, axis=-1, keepdims=True)               # (B, 1, 1)
    S1 = s1r + fhw * const
    S2 = s2r + 2.0 * const * s1r + fhw * const * const

    # ---- GN2 stats straight from the rank-1 structure z_c = cq_c*s + cb_c
    #      (z never materialized):
    zc1 = cq * S1 + cb * fhw                                     # (B, C, 1)
    zc2 = cq * cq * S2 + 2.0 * cq * cb * S1 + cb * cb * fhw      # (B, C, 1)
    mean2 = gsum(zc1) * inv_cnt
    var2 = gsum(zc2) * inv_cnt - mean2 * mean2
    inv2 = bcast_c(lax.rsqrt(var2 + eps))                        # (B, C, 1)
    mean2c = bcast_c(mean2)

    # ---- single fused output pass: o = alpha_c * sw + beta_c + x
    alpha = cq * inv2 * gn_w                                     # (B, C, 1)
    beta = (cq * const + cb - mean2c) * inv2 * gn_w + gn_b       # (B, C, 1)
    o_ref[...] = (alpha * sw + beta + x).astype(o_ref.dtype)


def _choose_batch_tile(N, C, HW_pad, dtype_bytes,
                       block_budget_bytes=4 * 1024 * 1024):
    """Samples per grid step.

    Big enough to amortize the ~0.35us per-step overhead, small enough that
    double-buffered in+out blocks stay well inside every generation's VMEM
    (v7x: 64 MiB physical). Chosen as a divisor of N so the wrapper never has
    to pad/copy X along the batch axis in HBM. We do not force extra grid
    steps for v7x megacore: for batch sizes where that matters, the 4 MiB
    budget already yields many steps, and forced splits only hurt the
    single-TensorCore parts (v5e/v6e).
    """
    per_sample = max(1, C * HW_pad * dtype_bytes)
    cap = max(1, min(N, block_budget_bytes // per_sample))
    for d in range(int(cap), 0, -1):
        if N % d == 0:
            return d
    return 1


def cls_attn_linear(X, cls, params):
    """Pallas implementation of clsAttn_Linear.forward.

    X   : (N, C, H, W) float32
    cls : (N, cls_dim) float32
    # TODO(synk): the reference forward() has no `return` statement (returns
    # None in PyTorch); we return the computed tensor `out_emb(X) + res`.
    """
    N, C, H, W = X.shape
    HW = H * W
    num_groups = C // 4 if C > 4 else 1
    assert C % num_groups == 0, "GroupNorm requires C % num_groups == 0"

    # --- tiny cls -> inCh glue, plain JAX (O(N*C*cls_dim + N*C^2)) ---
    # NOTE the intentional swap (mirrors the reference forward): K comes from
    # Q_emb and Q from K_emb; do not "fix".
    k_raw = cls @ params["q_emb_w"].T + params["q_emb_b"]        # (N, C)
    q_raw = cls @ params["k_emb_w"].T + params["k_emb_b"]        # (N, C)
    k_map = jnp.where(k_raw > 0, k_raw, jnp.expm1(k_raw)) + 1.0
    q_map = (jnp.where(q_raw > 0, q_raw, jnp.expm1(q_raw)) + 1.0) / math.sqrt(C)
    conv_w2d = params["conv_w"].reshape(C, C)                    # (out, in)
    # rank-1 rewrite of the 1x1 conv: conv(q (x) s) = (W @ q) (x) s + b
    cq = q_map @ conv_w2d.T                                      # (N, C)

    k3 = k_map.astype(jnp.float32)[:, :, None]                   # (N, C, 1)
    cq3 = cq.astype(jnp.float32)[:, :, None]                     # (N, C, 1)

    x2 = X.reshape(N, C, HW)
    HW_pad = ((HW + 127) // 128) * 128
    if HW_pad != HW:
        # Only when HW isn't 128-aligned. Zero padding keeps the in-kernel
        # single-pass statistics exact without any masks.
        x2 = jnp.pad(x2, ((0, 0), (0, 0), (0, HW_pad - HW)))

    dtype_bytes = jnp.dtype(X.dtype).itemsize
    B_TILE = _choose_batch_tile(N, C, HW_pad, dtype_bytes)
    n_tiles = N // B_TILE

    pdtype = jnp.float32
    zeros_c = jnp.zeros((C,), pdtype)
    packed = jnp.stack([params["ln_w"].astype(pdtype),
                        params["ln_b"].astype(pdtype),
                        params["gn_w"].astype(pdtype),
                        params["gn_b"].astype(pdtype),
                        params["conv_b"].reshape(C).astype(pdtype),
                        zeros_c, zeros_c, zeros_c], axis=1)      # (C, 8)

    block_bytes = B_TILE * C * HW_pad * dtype_bytes
    # double-buffered in + out blocks + surviving small temporaries; cap below
    # v7x's 64 MiB physical VMEM.
    vmem_limit = int(min(56 * 1024 * 1024,
                         max(32 * 1024 * 1024, 6 * block_bytes + (4 << 20))))
    # TODO(synk): for very large single samples (C*HW*4 bytes >~ 8 MiB) an
    # extra HW grid axis with two-pass GroupNorm stats would be needed (v7x).

    cost = pl.CostEstimate(
        flops=int(8 * N * C * HW_pad),
        transcendentals=int(2 * N * num_groups),
        bytes_accessed=int(2 * N * C * HW_pad * dtype_bytes + 3 * N * C * 4),
    )

    kernel = functools.partial(cls_attn_kernel, num_groups=num_groups, hw=HW)
    out = pl.pallas_call(
        kernel,
        out_shape=jax.ShapeDtypeStruct((N, C, HW_pad), X.dtype),
        grid=(n_tiles,),
        in_specs=[
            pl.BlockSpec((B_TILE, C, HW_pad), lambda n: (n, 0, 0)),  # X block
            pl.BlockSpec((B_TILE, C, 1), lambda n: (n, 0, 0)),       # k map
            pl.BlockSpec((B_TILE, C, 1), lambda n: (n, 0, 0)),       # W @ q
            pl.BlockSpec((C, 8), lambda n: (0, 0)),                  # packed affine
        ],
        out_specs=pl.BlockSpec((B_TILE, C, HW_pad), lambda n: (n, 0, 0)),
        compiler_params=pltpu.CompilerParams(
            dimension_semantics=("parallel",),
            vmem_limit_bytes=vmem_limit),
        cost_estimate=cost,
    )(x2, k3, cq3, packed)

    if HW_pad != HW:
        out = out[:, :, :HW]
    return out.reshape(N, C, H, W)


def cls_attn_linear_ref(X, cls, params):
    """Pure-JAX reference (mirrors the PyTorch forward) for verification."""
    N, C, H, W = X.shape
    num_groups = C // 4 if C > 4 else 1

    def gn(x, w, b, eps=1e-5):
        xg = x.reshape(N, num_groups, C // num_groups, H, W)
        mean = jnp.mean(xg, axis=(2, 3, 4), keepdims=True)
        var = jnp.mean(jnp.square(xg - mean), axis=(2, 3, 4), keepdims=True)
        xn = ((xg - mean) / jnp.sqrt(var + eps)).reshape(N, C, H, W)
        return xn * w[None, :, None, None] + b[None, :, None, None]

    res = X
    Xn = gn(X, params["ln_w"], params["ln_b"])
    K = cls @ params["q_emb_w"].T + params["q_emb_b"]
    Q = cls @ params["k_emb_w"].T + params["k_emb_b"]
    K = (jnp.where(K > 0, K, jnp.expm1(K)) + 1.0)[:, :, None]        # (N,C,1)
    Q = (jnp.where(Q > 0, Q, jnp.expm1(Q)) + 1.0)[:, :, None] / math.sqrt(C)
    S = jnp.einsum('nclw,nco->nolw', Xn, K)
    Y = jnp.einsum('nolw,nco->nclw', S, Q)
    Z = jnp.einsum('oi,nilw->nolw', params["conv_w"], Y) \
        + params["conv_b"][None, :, None, None]
    return gn(Z, params["gn_w"], params["gn_b"]) + res


if __name__ == "__main__":
    key = jax.random.PRNGKey(0)
    N, C, H, W, CLS = 2, 8, 16, 16, 16  # inCh=8 > 4 -> num_groups = 2

    ks = jax.random.split(key, 12)
    X = jax.random.normal(ks[0], (N, C, H, W), jnp.float32)
    cls_vec = jax.random.normal(ks[1], (N, CLS), jnp.float32)

    params = {
        "q_emb_w": jax.random.normal(ks[2], (C, CLS), jnp.float32) * 0.2,
        "q_emb_b": jax.random.normal(ks[3], (C,), jnp.float32) * 0.1,
        "k_emb_w": jax.random.normal(ks[4], (C, CLS), jnp.float32) * 0.2,
        "k_emb_b": jax.random.normal(ks[5], (C,), jnp.float32) * 0.1,
        "conv_w": jax.random.normal(ks[6], (C, C), jnp.float32) * 0.3,
        "conv_b": jax.random.normal(ks[7], (C,), jnp.float32) * 0.1,
        "ln_w": 1.0 + 0.1 * jax.random.normal(ks[8], (C,), jnp.float32),
        "ln_b": 0.1 * jax.random.normal(ks[9], (C,), jnp.float32),
        "gn_w": 1.0 + 0.1 * jax.random.normal(ks[10], (C,), jnp.float32),
        "gn_b": 0.1 * jax.random.normal(ks[11], (C,), jnp.float32),
    }

    out = cls_attn_linear(X, cls_vec, params)
    out = jax.block_until_ready(out)

    ref = cls_attn_linear_ref(X, cls_vec, params)
    if not jnp.allclose(out, ref, rtol=2e-4, atol=2e-4):
        raise AssertionError(
            f"mismatch: max abs err = {jnp.max(jnp.abs(out - ref))}")
    print("KERNEL_OK")
</pallas_src>

<mosaic_0001>
module attributes {stable_mosaic.version = 11 : i64} {
  func.func @cls_attn_kernel(%arg0: i32, %arg1: memref<2x8x256xf32, #tpu.memory_space<vmem>>, %arg2: memref<2x8x1xf32, #tpu.memory_space<vmem>>, %arg3: memref<2x8x1xf32, #tpu.memory_space<vmem>>, %arg4: memref<8x8xf32, #tpu.memory_space<vmem>>, %arg5: memref<2x8x256xf32, #tpu.memory_space<vmem>>) attributes {dimension_semantics = [#tpu.dimension_semantics<parallel>], iteration_bounds = array<i64: 1>, scalar_prefetch = 0 : i64, scratch_operands = 0 : i64, tpu.core_type = #tpu.core_type<tc>, window_params = [{transform_indices = @transform_0, window_bounds = array<i64: 2, 8, 256>}, {transform_indices = @transform_1, window_bounds = array<i64: 2, 8, 1>}, {transform_indices = @transform_2, window_bounds = array<i64: 2, 8, 1>}, {pipeline_mode = #tpu.pipeline_mode<synchronous>, transform_indices = @transform_3, window_bounds = array<i64: 8, 8>}, {transform_indices = @transform_4, window_bounds = array<i64: 2, 8, 256>}]} {
    %c0 = arith.constant 0 : index
    %c0_0 = arith.constant 0 : index
    %c0_1 = arith.constant 0 : index
    %0 = vector.load %arg1[%c0, %c0_0, %c0_1] : memref<2x8x256xf32, #tpu.memory_space<vmem>>, vector<2x8x256xf32>
    %c0_2 = arith.constant 0 : index
    %c0_3 = arith.constant 0 : index
    %1 = vector.load %arg4[%c0_2, %c0_3] : memref<8x8xf32, #tpu.memory_space<vmem>>, vector<8x1xf32>
    %c0_4 = arith.constant 0 : index
    %c1 = arith.constant 1 : index
    %2 = vector.load %arg4[%c0_4, %c1] : memref<8x8xf32, #tpu.memory_space<vmem>>, vector<8x1xf32>
    %c0_5 = arith.constant 0 : index
    %c2 = arith.constant 2 : index
    %3 = vector.load %arg4[%c0_5, %c2] : memref<8x8xf32, #tpu.memory_space<vmem>>, vector<8x1xf32>
    %c0_6 = arith.constant 0 : index
    %c3 = arith.constant 3 : index
    %4 = vector.load %arg4[%c0_6, %c3] : memref<8x8xf32, #tpu.memory_space<vmem>>, vector<8x1xf32>
    %c0_7 = arith.constant 0 : index
    %c4 = arith.constant 4 : index
    %5 = vector.load %arg4[%c0_7, %c4] : memref<8x8xf32, #tpu.memory_space<vmem>>, vector<8x1xf32>
    %c0_8 = arith.constant 0 : index
    %c0_9 = arith.constant 0 : index
    %c0_10 = arith.constant 0 : index
    %6 = vector.load %arg2[%c0_8, %c0_9, %c0_10] : memref<2x8x1xf32, #tpu.memory_space<vmem>>, vector<2x8x1xf32>
    %c0_11 = arith.constant 0 : index
    %c0_12 = arith.constant 0 : index
    %c0_13 = arith.constant 0 : index
    %7 = vector.load %arg3[%c0_11, %c0_12, %c0_13] : memref<2x8x1xf32, #tpu.memory_space<vmem>>, vector<2x8x1xf32>
    %cst = arith.constant dense<0.000000e+00> : vector<2x8xf32>
    %8 = vector.multi_reduction <add>, %0, %cst [2] : vector<2x8x256xf32> to vector<2x8xf32>
    %9 = vector.shape_cast %8 : vector<2x8xf32> to vector<2x8x1xf32>
    %10 = arith.mulf %0, %0 : vector<2x8x256xf32>
    %cst_14 = arith.constant dense<0.000000e+00> : vector<2x8xf32>
    %11 = vector.multi_reduction <add>, %10, %cst_14 [2] : vector<2x8x256xf32> to vector<2x8xf32>
    %12 = vector.shape_cast %11 : vector<2x8xf32> to vector<2x8x1xf32>
    %13 = vector.shape_cast %9 : vector<2x8x1xf32> to vector<2x2x4x1xf32>
    %cst_15 = arith.constant dense<0.000000e+00> : vector<2x2x1xf32>
    %14 = vector.multi_reduction <add>, %13, %cst_15 [2] : vector<2x2x4x1xf32> to vector<2x2x1xf32>
    %15 = vector.shape_cast %14 : vector<2x2x1xf32> to vector<2x2x1x1xf32>
    %cst_16 = arith.constant 9.765625E-4 : f32
    %16 = vector.broadcast %cst_16 : f32 to vector<2x2x1x1xf32>
    %17 = arith.mulf %15, %16 : vector<2x2x1x1xf32>
    %18 = vector.shape_cast %12 : vector<2x8x1xf32> to vector<2x2x4x1xf32>
    %cst_17 = arith.constant dense<0.000000e+00> : vector<2x2x1xf32>
    %19 = vector.multi_reduction <add>, %18, %cst_17 [2] : vector<2x2x4x1xf32> to vector<2x2x1xf32>
    %20 = vector.shape_cast %19 : vector<2x2x1xf32> to vector<2x2x1x1xf32>
    %cst_18 = arith.constant 9.765625E-4 : f32
    %21 = vector.broadcast %cst_18 : f32 to vector<2x2x1x1xf32>
    %22 = arith.mulf %20, %21 : vector<2x2x1x1xf32>
    %23 = arith.mulf %17, %17 : vector<2x2x1x1xf32>
    %24 = arith.subf %22, %23 : vector<2x2x1x1xf32>
    %cst_19 = arith.constant 9.99999974E-6 : f32
    %25 = vector.broadcast %cst_19 : f32 to vector<2x2x1x1xf32>
    %26 = arith.addf %24, %25 : vector<2x2x1x1xf32>
    %27 = math.rsqrt %26 : vector<2x2x1x1xf32>
    %28 = vector.shape_cast %27 : vector<2x2x1x1xf32> to vector<2x2x1x1xf32>
    %29 = vector.broadcast %28 : vector<2x2x1x1xf32> to vector<2x2x4x1xf32>
    %30 = vector.shape_cast %29 : vector<2x2x4x1xf32> to vector<2x8x1xf32>
    %31 = vector.shape_cast %17 : vector<2x2x1x1xf32> to vector<2x2x1x1xf32>
    %32 = vector.broadcast %31 : vector<2x2x1x1xf32> to vector<2x2x4x1xf32>
    %33 = vector.shape_cast %32 : vector<2x2x4x1xf32> to vector<2x8x1xf32>
    %34 = vector.shape_cast %1 : vector<8x1xf32> to vector<1x8x1xf32>
    %35 = vector.broadcast %34 : vector<1x8x1xf32> to vector<2x8x1xf32>
    %36 = arith.mulf %6, %35 : vector<2x8x1xf32>
    %37 = arith.mulf %36, %30 : vector<2x8x1xf32>
    %38 = vector.shape_cast %1 : vector<8x1xf32> to vector<1x8x1xf32>
    %39 = vector.broadcast %38 : vector<1x8x1xf32> to vector<2x8x1xf32>
    %40 = arith.mulf %39, %30 : vector<2x8x1xf32>
    %41 = arith.mulf %40, %33 : vector<2x8x1xf32>
    %42 = vector.shape_cast %2 : vector<8x1xf32> to vector<1x8x1xf32>
    %43 = vector.broadcast %42 : vector<1x8x1xf32> to vector<2x8x1xf32>
    %44 = arith.subf %43, %41 : vector<2x8x1xf32>
    %45 = arith.mulf %6, %44 : vector<2x8x1xf32>
    %cst_20 = arith.constant dense<0.000000e+00> : vector<2x1xf32>
    %46 = vector.multi_reduction <add>, %45, %cst_20 [1] : vector<2x8x1xf32> to vector<2x1xf32>
    %47 = vector.shape_cast %46 : vector<2x1xf32> to vector<2x1x1xf32>
    %48 = vector.broadcast %37 : vector<2x8x1xf32> to vector<2x8x256xf32>
    %49 = arith.mulf %0, %48 : vector<2x8x256xf32>
    %cst_21 = arith.constant dense<0.000000e+00> : vector<2x256xf32>
    %50 = vector.multi_reduction <add>, %49, %cst_21 [1] : vector<2x8x256xf32> to vector<2x256xf32>
    %51 = vector.shape_cast %50 : vector<2x256xf32> to vector<2x1x256xf32>
    %cst_22 = arith.constant dense<0.000000e+00> : vector<2x1xf32>
    %52 = vector.multi_reduction <add>, %51, %cst_22 [2] : vector<2x1x256xf32> to vector<2x1xf32>
    %53 = vector.shape_cast %52 : vector<2x1xf32> to vector<2x1x1xf32>
    %54 = arith.mulf %51, %51 : vector<2x1x256xf32>
    %cst_23 = arith.constant dense<0.000000e+00> : vector<2x1xf32>
    %55 = vector.multi_reduction <add>, %54, %cst_23 [2] : vector<2x1x256xf32> to vector<2x1xf32>
    %56 = vector.shape_cast %55 : vector<2x1xf32> to vector<2x1x1xf32>
    %cst_24 = arith.constant 2.560000e+02 : f32
    %57 = vector.broadcast %cst_24 : f32 to vector<2x1x1xf32>
    %58 = arith.mulf %57, %47 : vector<2x1x1xf32>
    %59 = arith.addf %53, %58 : vector<2x1x1xf32>
    %cst_25 = arith.constant 2.000000e+00 : f32
    %60 = vector.broadcast %cst_25 : f32 to vector<2x1x1xf32>
    %61 = arith.mulf %60, %47 : vector<2x1x1xf32>
    %62 = arith.mulf %61, %53 : vector<2x1x1xf32>
    %63 = arith.addf %56, %62 : vector<2x1x1xf32>
    %cst_26 = arith.constant 2.560000e+02 : f32
    %64 = vector.broadcast %cst_26 : f32 to vector<2x1x1xf32>
    %65 = arith.mulf %64, %47 : vector<2x1x1xf32>
    %66 = arith.mulf %65, %47 : vector<2x1x1xf32>
    %67 = arith.addf %63, %66 : vector<2x1x1xf32>
    %68 = vector.broadcast %59 : vector<2x1x1xf32> to vector<2x8x1xf32>
    %69 = arith.mulf %7, %68 : vector<2x8x1xf32>
    %cst_27 = arith.constant 2.560000e+02 : f32
    %70 = vector.broadcast %cst_27 : f32 to vector<8x1xf32>
    %71 = arith.mulf %5, %70 : vector<8x1xf32>
    %72 = vector.shape_cast %71 : vector<8x1xf32> to vector<1x8x1xf32>
    %73 = vector.broadcast %72 : vector<1x8x1xf32> to vector<2x8x1xf32>
    %74 = arith.addf %69, %73 : vector<2x8x1xf32>
    %75 = arith.mulf %7, %7 : vector<2x8x1xf32>
    %76 = vector.broadcast %67 : vector<2x1x1xf32> to vector<2x8x1xf32>
    %77 = arith.mulf %75, %76 : vector<2x8x1xf32>
    %cst_28 = arith.constant 2.000000e+00 : f32
    %78 = vector.broadcast %cst_28 : f32 to vector<2x8x1xf32>
    %79 = arith.mulf %78, %7 : vector<2x8x1xf32>
    %80 = vector.shape_cast %5 : vector<8x1xf32> to vector<1x8x1xf32>
    %81 = vector.broadcast %80 : vector<1x8x1xf32> to vector<2x8x1xf32>
    %82 = arith.mulf %79, %81 : vector<2x8x1xf32>
    %83 = vector.broadcast %59 : vector<2x1x1xf32> to vector<2x8x1xf32>
    %84 = arith.mulf %82, %83 : vector<2x8x1xf32>
    %85 = arith.addf %77, %84 : vector<2x8x1xf32>
    %86 = arith.mulf %5, %5 : vector<8x1xf32>
    %cst_29 = arith.constant 2.560000e+02 : f32
    %87 = vector.broadcast %cst_29 : f32 to vector<8x1xf32>
    %88 = arith.mulf %86, %87 : vector<8x1xf32>
    %89 = vector.shape_cast %88 : vector<8x1xf32> to vector<1x8x1xf32>
    %90 = vector.broadcast %89 : vector<1x8x1xf32> to vector<2x8x1xf32>
    %91 = arith.addf %85, %90 : vector<2x8x1xf32>
    %92 = vector.shape_cast %74 : vector<2x8x1xf32> to vector<2x2x4x1xf32>
    %cst_30 = arith.constant dense<0.000000e+00> : vector<2x2x1xf32>
    %93 = vector.multi_reduction <add>, %92, %cst_30 [2] : vector<2x2x4x1xf32> to vector<2x2x1xf32>
    %94 = vector.shape_cast %93 : vector<2x2x1xf32> to vector<2x2x1x1xf32>
    %cst_31 = arith.constant 9.765625E-4 : f32
    %95 = vector.broadcast %cst_31 : f32 to vector<2x2x1x1xf32>
    %96 = arith.mulf %94, %95 : vector<2x2x1x1xf32>
    %97 = vector.shape_cast %91 : vector<2x8x1xf32> to vector<2x2x4x1xf32>
    %cst_32 = arith.constant dense<0.000000e+00> : vector<2x2x1xf32>
    %98 = vector.multi_reduction <add>, %97, %cst_32 [2] : vector<2x2x4x1xf32> to vector<2x2x1xf32>
    %99 = vector.shape_cast %98 : vector<2x2x1xf32> to vector<2x2x1x1xf32>
    %cst_33 = arith.constant 9.765625E-4 : f32
    %100 = vector.broadcast %cst_33 : f32 to vector<2x2x1x1xf32>
    %101 = arith.mulf %99, %100 : vector<2x2x1x1xf32>
    %102 = arith.mulf %96, %96 : vector<2x2x1x1xf32>
    %103 = arith.subf %101, %102 : vector<2x2x1x1xf32>
    %cst_34 = arith.constant 9.99999974E-6 : f32
    %104 = vector.broadcast %cst_34 : f32 to vector<2x2x1x1xf32>
    %105 = arith.addf %103, %104 : vector<2x2x1x1xf32>
    %106 = math.rsqrt %105 : vector<2x2x1x1xf32>
    %107 = vector.shape_cast %106 : vector<2x2x1x1xf32> to vector<2x2x1x1xf32>
    %108 = vector.broadcast %107 : vector<2x2x1x1xf32> to vector<2x2x4x1xf32>
    %109 = vector.shape_cast %108 : vector<2x2x4x1xf32> to vector<2x8x1xf32>
    %110 = vector.shape_cast %96 : vector<2x2x1x1xf32> to vector<2x2x1x1xf32>
    %111 = vector.broadcast %110 : vector<2x2x1x1xf32> to vector<2x2x4x1xf32>
    %112 = vector.shape_cast %111 : vector<2x2x4x1xf32> to vector<2x8x1xf32>
    %113 = arith.mulf %7, %109 : vector<2x8x1xf32>
    %114 = vector.shape_cast %3 : vector<8x1xf32> to vector<1x8x1xf32>
    %115 = vector.broadcast %114 : vector<1x8x1xf32> to vector<2x8x1xf32>
    %116 = arith.mulf %113, %115 : vector<2x8x1xf32>
    %117 = vector.broadcast %47 : vector<2x1x1xf32> to vector<2x8x1xf32>
    %118 = arith.mulf %7, %117 : vector<2x8x1xf32>
    %119 = vector.shape_cast %5 : vector<8x1xf32> to vector<1x8x1xf32>
    %120 = vector.broadcast %119 : vector<1x8x1xf32> to vector<2x8x1xf32>
    %121 = arith.addf %118, %120 : vector<2x8x1xf32>
    %122 = arith.subf %121, %112 : vector<2x8x1xf32>
    %123 = arith.mulf %122, %109 : vector<2x8x1xf32>
    %124 = vector.shape_cast %3 : vector<8x1xf32> to vector<1x8x1xf32>
    %125 = vector.broadcast %124 : vector<1x8x1xf32> to vector<2x8x1xf32>
    %126 = arith.mulf %123, %125 : vector<2x8x1xf32>
    %127 = vector.shape_cast %4 : vector<8x1xf32> to vector<1x8x1xf32>
    %128 = vector.broadcast %127 : vector<1x8x1xf32> to vector<2x8x1xf32>
    %129 = arith.addf %126, %128 : vector<2x8x1xf32>
    %130 = vector.broadcast %116 : vector<2x8x1xf32> to vector<2x8x256xf32>
    %131 = vector.broadcast %51 : vector<2x1x256xf32> to vector<2x8x256xf32>
    %132 = arith.mulf %130, %131 : vector<2x8x256xf32>
    %133 = vector.broadcast %129 : vector<2x8x1xf32> to vector<2x8x256xf32>
    %134 = arith.addf %132, %133 : vector<2x8x256xf32>
    %135 = arith.addf %134, %0 : vector<2x8x256xf32>
    %c0_35 = arith.constant 0 : index
    %c0_36 = arith.constant 0 : index
    %c0_37 = arith.constant 0 : index
    %136 = vector.load %arg5[%c0_35, %c0_36, %c0_37] : memref<2x8x256xf32, #tpu.memory_space<vmem>>, vector<2x8x256xf32>
    tpu.vector_store %arg5[%c0_35, %c0_36, %c0_37], %135 {strides = array<i32>} : memref<2x8x256xf32, #tpu.memory_space<vmem>>, vector<2x8x256xf32>,
    return
  }
  func.func @transform_0(%arg0: i32) -> (i32, i32, i32) {
    %c0_i32 = arith.constant 0 : i32
    %c0_i32_0 = arith.constant 0 : i32
    %c0_i32_1 = arith.constant 0 : i32
    return %arg0, %c0_i32, %c0_i32_0 : i32, i32, i32
  }
  func.func @transform_1(%arg0: i32) -> (i32, i32, i32) {
    %c0_i32 = arith.constant 0 : i32
    %c0_i32_0 = arith.constant 0 : i32
    %c0_i32_1 = arith.constant 0 : i32
    return %arg0, %c0_i32, %c0_i32_0 : i32, i32, i32
  }
  func.func @transform_2(%arg0: i32) -> (i32, i32, i32) {
    %c0_i32 = arith.constant 0 : i32
    %c0_i32_0 = arith.constant 0 : i32
    %c0_i32_1 = arith.constant 0 : i32
    return %arg0, %c0_i32, %c0_i32_0 : i32, i32, i32
  }
  func.func @transform_3(%arg0: i32) -> (i32, i32) {
    %c0_i32 = arith.constant 0 : i32
    %c0_i32_0 = arith.constant 0 : i32
    %c0_i32_1 = arith.constant 0 : i32
    return %c0_i32, %c0_i32_0 : i32, i32
  }
  func.func @transform_4(%arg0: i32) -> (i32, i32, i32) {
    %c0_i32 = arith.constant 0 : i32
    %c0_i32_0 = arith.constant 0 : i32
    %c0_i32_1 = arith.constant 0 : i32
    return %arg0, %c0_i32, %c0_i32_0 : i32, i32, i32
  }
}

</mosaic_0001>

<llo_original>
// kernel: tpu_custom_call.1
$region0: #{tpu_custom_call.1}
  #allocation0 [shape = 'u32[]', space=smem, size = 0x4, offset = 0x4, fixed_abs, tag = 'smem constant byte address 0x4 - core index']
  #allocation1 [shape = 'u32[144,128]{1,0:T(1,128)}', space=vmem, size = 0x12000, scoped, tag = 'internal scratch']
  %s0 = inlined_call_operand.vmem [shape: f32[2,8,256], index: 0, kind: input, shape index: {}]
  %s1 = inlined_call_operand.vmem [shape: f32[2,8,1], index: 1, kind: input, shape index: {}]
  %s2 = inlined_call_operand.vmem [shape: f32[2,8,1], index: 2, kind: input, shape index: {}]
  %s3 = inlined_call_operand.vmem [shape: f32[8,8], index: 3, kind: input, shape index: {}]
  %s4 = inlined_call_operand.hbm [shape: f32[2,8,256], index: 4, kind: output, shape index: {}]
  %s5 = sld [smem:[#allocation0]]
  $region26: #{tpu_custom_call.1} parent=0
    _
  %s7 = ssub.s32 1, %s5
  %s8 = scalar_select 0, %s7, %s5
  $region1: #{tpu_custom_call.1} parent=0
    #allocation2 [shape = 'u8[16384]{0}', space=vmem, size = 0x4000, scoped, tag = 'output window, operand 0, single buffered']
    #allocation3 [shape = 's32[1]{0}', space=sflag, size = 0x4, scoped, tag = 'scoped memory for tpu_custom_call.1']
    %9 = vsyncpa [#allocation3], 0
    // Predicated region
    $region2: #{tpu_custom_call.1} parent=1 // pred_check
      _
    $region3: #{tpu_custom_call.1} parent=1 // pred_check_branch
      %11 = sbr.rel (0) target = $region5
    $region4: #{tpu_custom_call.1} parent=1 // pred_region
      _
    $region5: #{tpu_custom_call.1} parent=1 // pred_fallthru
      _
    // Predicated region
    $region6: #{tpu_custom_call.1} parent=1 // pred_check
      _
    $region7: #{tpu_custom_call.1} parent=1 // pred_check_branch
      %13 = sbr.rel (0) target = $region9
    $region8: #{tpu_custom_call.1} parent=1 // pred_region
      _
    $region9: #{tpu_custom_call.1} parent=1 // pred_fallthru
      _
    // Predicated region
    $region10: #{tpu_custom_call.1} parent=1 // pred_check
      _
    $region11: #{tpu_custom_call.1} parent=1 // pred_check_branch
      %15 = sbr.rel (0) target = $region13
    $region12: #{tpu_custom_call.1} parent=1 // pred_region
      _
    $region13: #{tpu_custom_call.1} parent=1 // pred_fallthru
      _
    // Predicated region
    $region14: #{tpu_custom_call.1} parent=1 // pred_check
      _
    $region15: #{tpu_custom_call.1} parent=1 // pred_check_branch
      %17 = sbr.rel (0) target = $region17
    $region16: #{tpu_custom_call.1} parent=1 // pred_region
      _
    $region17: #{tpu_custom_call.1} parent=1 // pred_fallthru
      _
    %v18 = vld [vmem:[%s0] sm:$0xff]
    %v19 = vld [vmem:[%s0 + $0x8] sm:$0xff]
    %v20 = vld [vmem:[%s0 + $0x10] sm:$0xff]
    %v21 = vld [vmem:[%s0 + $0x18] sm:$0xff]
    %v22 = vld [vmem:[%s3] sm:$0xff]
    %v23 = vld [vmem:[%s1] sm:$0xff]
    %v24 = vld [vmem:[%s1 + $0x8] sm:$0xff]
    %v25 = vld [vmem:[%s2] sm:$0xff]
    %v26 = vld [vmem:[%s2 + $0x8] sm:$0xff]
    %v27 = vadd.f32 %v18, %v19
    %28 = vadd.xlane.f32.xlu0 %v27
    %v29 = vpop.xlane.xlu0 %28
    %v30 = vadd.f32 %v20, %v21
    %31 = vadd.xlane.f32.xlu0 %v30
    %v32 = vpop.xlane.xlu0 %31
    %v33 = vmul.f32 %v18, %v18
    %v34 = vmul.f32 %v19, %v19
    %v35 = vmul.f32 %v20, %v20
    %v36 = vmul.f32 %v21, %v21
    %v37 = vadd.f32 %v33, %v34
    %38 = vadd.xlane.f32.xlu0 %v37
    %v39 = vpop.xlane.xlu0 %38
    %v40 = vadd.f32 %v35, %v36
    %41 = vadd.xlane.f32.xlu0 %v40
    %v42 = vpop.xlane.xlu0 %41
    %v46 = vunpack.c.l.s4 839922192
    %v47 = vunpack.c.0.s8 %v46
    %v48 = vlaneseq
    %v49 = vshrl.u32 %v48, 7
    %v50 = vsub.s32 %v47, %v49
    %v51 = vrot.slane %v29, %v50
    %v53 = vunpack.c.l.s4 1985246804
    %v54 = vunpack.c.0.s8 %v53
    %v55 = vlaneseq
    %v56 = vshrl.u32 %v55, 7
    %v57 = vsub.s32 %v54, %v56
    %v58 = vrot.slane %v29, %v57
    %v60 = vunpack.c.l.s4 839922192
    %v61 = vunpack.c.0.s8 %v60
    %v62 = vlaneseq
    %v63 = vshrl.u32 %v62, 7
    %v64 = vsub.s32 %v61, %v63
    %v65 = vrot.slane %v32, %v64
    %v67 = vunpack.c.l.s4 1985246804
    %v68 = vunpack.c.0.s8 %v67
    %v69 = vlaneseq
    %v70 = vshrl.u32 %v69, 7
    %v71 = vsub.s32 %v68, %v70
    %v72 = vrot.slane %v32, %v71
    %vm77 = vcmask 1043456
    %v78 = vsel %vm77, %v51, 0.0
    %v79 = vrot.slane %v78, 4
    %v80 = vadd.f32 %v78, %v79
    %v81 = vrot.slane %v80, 2
    %v82 = vadd.f32 %v80, %v81
    %v83 = vrot.slane %v82, 1
    %v84 = vadd.f32 %v82, %v83
    %v85 = vsel %vm77, %v58, 0.0
    %v86 = vrot.slane %v85, 4
    %v87 = vadd.f32 %v85, %v86
    %v88 = vrot.slane %v87, 2
    %v89 = vadd.f32 %v87, %v88
    %v90 = vrot.slane %v89, 1
    %v91 = vadd.f32 %v89, %v90
    %v92 = vsel %vm77, %v65, 0.0
    %v93 = vrot.slane %v92, 4
    %v94 = vadd.f32 %v92, %v93
    %v95 = vrot.slane %v94, 2
    %v96 = vadd.f32 %v94, %v95
    %v97 = vrot.slane %v96, 1
    %v98 = vadd.f32 %v96, %v97
    %v99 = vsel %vm77, %v72, 0.0
    %v100 = vrot.slane %v99, 4
    %v101 = vadd.f32 %v99, %v100
    %v102 = vrot.slane %v101, 2
    %v103 = vadd.f32 %v101, %v102
    %v104 = vrot.slane %v103, 1
    %v105 = vadd.f32 %v103, %v104
    %v106 = vmul.f32 %v84, 0.0009765625
    %v107 = vmul.f32 %v91, 0.0009765625
    %v108 = vmul.f32 %v98, 0.0009765625
    %v109 = vmul.f32 %v105, 0.0009765625
    %v113 = vunpack.c.l.s4 839922192
    %v114 = vunpack.c.0.s8 %v113
    %v115 = vlaneseq
    %v116 = vshrl.u32 %v115, 7
    %v117 = vsub.s32 %v114, %v116
    %v118 = vrot.slane %v39, %v117
    %v120 = vunpack.c.l.s4 1985246804
    %v121 = vunpack.c.0.s8 %v120
    %v122 = vlaneseq
    %v123 = vshrl.u32 %v122, 7
    %v124 = vsub.s32 %v121, %v123
    %v125 = vrot.slane %v39, %v124
    %v127 = vunpack.c.l.s4 839922192
    %v128 = vunpack.c.0.s8 %v127
    %v129 = vlaneseq
    %v130 = vshrl.u32 %v129, 7
    %v131 = vsub.s32 %v128, %v130
    %v132 = vrot.slane %v42, %v131
    %v134 = vunpack.c.l.s4 1985246804
    %v135 = vunpack.c.0.s8 %v134
    %v136 = vlaneseq
    %v137 = vshrl.u32 %v136, 7
    %v138 = vsub.s32 %v135, %v137
    %v139 = vrot.slane %v42, %v138
    %v144 = vsel %vm77, %v118, 0.0
    %v145 = vrot.slane %v144, 4
    %v146 = vadd.f32 %v144, %v145
    %v147 = vrot.slane %v146, 2
    %v148 = vadd.f32 %v146, %v147
    %v149 = vrot.slane %v148, 1
    %v150 = vadd.f32 %v148, %v149
    %v151 = vsel %vm77, %v125, 0.0
    %v152 = vrot.slane %v151, 4
    %v153 = vadd.f32 %v151, %v152
    %v154 = vrot.slane %v153, 2
    %v155 = vadd.f32 %v153, %v154
    %v156 = vrot.slane %v155, 1
    %v157 = vadd.f32 %v155, %v156
    %v158 = vsel %vm77, %v132, 0.0
    %v159 = vrot.slane %v158, 4
    %v160 = vadd.f32 %v158, %v159
    %v161 = vrot.slane %v160, 2
    %v162 = vadd.f32 %v160, %v161
    %v163 = vrot.slane %v162, 1
    %v164 = vadd.f32 %v162, %v163
    %v165 = vsel %vm77, %v139, 0.0
    %v166 = vrot.slane %v165, 4
    %v167 = vadd.f32 %v165, %v166
    %v168 = vrot.slane %v167, 2
    %v169 = vadd.f32 %v167, %v168
    %v170 = vrot.slane %v169, 1
    %v171 = vadd.f32 %v169, %v170
    %v172 = vmul.f32 %v150, 0.0009765625
    %v173 = vmul.f32 %v157, 0.0009765625
    %v174 = vmul.f32 %v164, 0.0009765625
    %v175 = vmul.f32 %v171, 0.0009765625
    %v176 = vmul.f32 %v106, %v106
    %v177 = vmul.f32 %v107, %v107
    %v178 = vmul.f32 %v108, %v108
    %v179 = vmul.f32 %v109, %v109
    %v180 = vsub.f32 %v172, %v176
    %v181 = vsub.f32 %v173, %v177
    %v182 = vsub.f32 %v174, %v178
    %v183 = vsub.f32 %v175, %v179
    %v184 = vadd.f32 %v180, 1e-05
    %v185 = vadd.f32 %v181, 1e-05
    %v186 = vadd.f32 %v182, 1e-05
    %v187 = vadd.f32 %v183, 1e-05
    %v188 = vrsqrt.pop %v184
    %v189 = vrsqrt.pop %v185
    %v190 = vrsqrt.pop %v186
    %v191 = vrsqrt.pop %v187
    %v192 = vmul.f32 %v23, %v22
    %v193 = vmul.f32 %v24, %v22
    %v198 = vcombine.low %v188, %v189
    %v199 = vcombine.low %v190, %v191
    %v202 = vmul.f32 %v192, %v198
    %v203 = vmul.f32 %v193, %v199
    %v204 = vmul.f32 %v22, %v198
    %v205 = vmul.f32 %v22, %v199
    %v210 = vcombine.low %v106, %v107
    %v211 = vcombine.low %v108, %v109
    %v214 = vmul.f32 %v204, %v210
    %v215 = vmul.f32 %v205, %v211
    %218 = vrot.lane.b32.xlu0 %v214, 1
    %v219 = vpop.permute.xlu0 %218
    %220 = vrot.lane.b32.xlu0 %v215, 1
    %v221 = vpop.permute.xlu0 %220
    %v224 = vsub.f32 %v22, %v219
    %v225 = vsub.f32 %v22, %v221
    %228 = vrot.lane.b32.xlu0 %v224, 127
    %v229 = vpop.permute.xlu0 %228
    %230 = vrot.lane.b32.xlu0 %v225, 127
    %v231 = vpop.permute.xlu0 %230
    %v234 = vmul.f32 %v23, %v229
    %v235 = vmul.f32 %v24, %v231
    %vm236 = vcmask 7168
    %v237 = vsel %vm236, %v234, 0.0
    %v238 = vrot.slane %v237, 4
    %v239 = vadd.f32 %v237, %v238
    %v240 = vrot.slane %v239, 2
    %v241 = vadd.f32 %v239, %v240
    %v242 = vrot.slane %v241, 1
    %v243 = vadd.f32 %v241, %v242
    %v244 = vsel %vm236, %v235, 0.0
    %v245 = vrot.slane %v244, 4
    %v246 = vadd.f32 %v244, %v245
    %v247 = vrot.slane %v246, 2
    %v248 = vadd.f32 %v246, %v247
    %v249 = vrot.slane %v248, 1
    %v250 = vadd.f32 %v248, %v249
    %252 = vset.pattern.permute.xlu0 0
    %253 = vperm.xlu0 %252, %v202
    %v254 = vpop.permute.xlu0 %253
    %257 = vset.pattern.permute.xlu0 0
    %258 = vperm.xlu0 %257, %v203
    %v259 = vpop.permute.xlu0 %258
    %v261 = vmul.f32 %v18, %v254
    %v262 = vmul.f32 %v19, %v254
    %v263 = vmul.f32 %v20, %v259
    %v264 = vmul.f32 %v21, %v259
    %v265 = vrot.slane %v261, 4
    %v266 = vadd.f32 %v261, %v265
    %v267 = vrot.slane %v266, 2
    %v268 = vadd.f32 %v266, %v267
    %v269 = vrot.slane %v268, 1
    %v270 = vadd.f32 %v268, %v269
    %v271 = vrot.slane %v262, 4
    %v272 = vadd.f32 %v262, %v271
    %v273 = vrot.slane %v272, 2
    %v274 = vadd.f32 %v272, %v273
    %v275 = vrot.slane %v274, 1
    %v276 = vadd.f32 %v274, %v275
    %v277 = vrot.slane %v263, 4
    %v278 = vadd.f32 %v263, %v277
    %v279 = vrot.slane %v278, 2
    %v280 = vadd.f32 %v278, %v279
    %v281 = vrot.slane %v280, 1
    %v282 = vadd.f32 %v280, %v281
    %v283 = vrot.slane %v264, 4
    %v284 = vadd.f32 %v264, %v283
    %v285 = vrot.slane %v284, 2
    %v286 = vadd.f32 %v284, %v285
    %v287 = vrot.slane %v286, 1
    %v288 = vadd.f32 %v286, %v287
    %v289 = vadd.f32 %v270, %v276
    %290 = vadd.xlane.f32.xlu0 %v289
    %v291 = vpop.xlane.xlu0 %290
    %v292 = vadd.f32 %v282, %v288
    %293 = vadd.xlane.f32.xlu0 %v292
    %v294 = vpop.xlane.xlu0 %293
    %v295 = vmul.f32 %v270, %v270
    %v296 = vmul.f32 %v276, %v276
    %v297 = vmul.f32 %v282, %v282
    %v298 = vmul.f32 %v288, %v288
    %v299 = vadd.f32 %v295, %v296
    %300 = vadd.xlane.f32.xlu0 %v299
    %v301 = vpop.xlane.xlu0 %300
    %v302 = vadd.f32 %v297, %v298
    %303 = vadd.xlane.f32.xlu0 %v302
    %v304 = vpop.xlane.xlu0 %303
    %v305 = vmul.f32 %v243, 256.0
    %v306 = vmul.f32 %v250, 256.0
    %v307 = vadd.f32 %v291, %v305
    %v308 = vadd.f32 %v294, %v306
    %v309 = vmul.f32 %v243, 2.0
    %v310 = vmul.f32 %v250, 2.0
    %v311 = vmul.f32 %v309, %v291
    %v312 = vmul.f32 %v310, %v294
    %v313 = vadd.f32 %v301, %v311
    %v314 = vadd.f32 %v304, %v312
    %v315 = vmul.f32 %v305, %v243
    %v316 = vmul.f32 %v306, %v250
    %v317 = vadd.f32 %v313, %v315
    %v318 = vadd.f32 %v314, %v316
    %v319 = vmul.f32 %v25, %v307
    %v320 = vmul.f32 %v26, %v308
    %v321 = vmul.f32 %v22, 256.0
    %323 = vrot.lane.b32.xlu0 %v321, 124
    %v324 = vpop.permute.xlu0 %323
    %v326 = vadd.f32 %v319, %v324
    %v327 = vadd.f32 %v320, %v324
    %v328 = vmul.f32 %v25, %v25
    %v329 = vmul.f32 %v26, %v26
    %v330 = vmul.f32 %v328, %v317
    %v331 = vmul.f32 %v329, %v318
    %v332 = vmul.f32 %v25, 2.0
    %v333 = vmul.f32 %v26, 2.0
    %335 = vrot.lane.b32.xlu0 %v22, 124
    %v336 = vpop.permute.xlu0 %335
    %v338 = vmul.f32 %v332, %v336
    %v339 = vmul.f32 %v333, %v336
    %v340 = vmul.f32 %v338, %v307
    %v341 = vmul.f32 %v339, %v308
    %v342 = vadd.f32 %v330, %v340
    %v343 = vadd.f32 %v331, %v341
    %v344 = vmul.f32 %v22, %v22
    %v345 = vmul.f32 %v344, 256.0
    %347 = vrot.lane.b32.xlu0 %v345, 124
    %v348 = vpop.permute.xlu0 %347
    %v350 = vadd.f32 %v342, %v348
    %v351 = vadd.f32 %v343, %v348
    %v354 = vcombine.high %v326, %v326
    %v355 = vcombine.high %v327, %v327
    %vm358 = vcmask 3072
    %v359 = vsel %vm358, %v326, 0.0
    %v360 = vrot.slane %v359, 4
    %v361 = vadd.f32 %v359, %v360
    %v362 = vrot.slane %v361, 2
    %v363 = vadd.f32 %v361, %v362
    %v364 = vrot.slane %v363, 1
    %v365 = vadd.f32 %v363, %v364
    %v366 = vsel %vm358, %v354, 0.0
    %v367 = vrot.slane %v366, 4
    %v368 = vadd.f32 %v366, %v367
    %v369 = vrot.slane %v368, 2
    %v370 = vadd.f32 %v368, %v369
    %v371 = vrot.slane %v370, 1
    %v372 = vadd.f32 %v370, %v371
    %v373 = vsel %vm358, %v327, 0.0
    %v374 = vrot.slane %v373, 4
    %v375 = vadd.f32 %v373, %v374
    %v376 = vrot.slane %v375, 2
    %v377 = vadd.f32 %v375, %v376
    %v378 = vrot.slane %v377, 1
    %v379 = vadd.f32 %v377, %v378
    %v380 = vsel %vm358, %v355, 0.0
    %v381 = vrot.slane %v380, 4
    %v382 = vadd.f32 %v380, %v381
    %v383 = vrot.slane %v382, 2
    %v384 = vadd.f32 %v382, %v383
    %v385 = vrot.slane %v384, 1
    %v386 = vadd.f32 %v384, %v385
    %v387 = vmul.f32 %v365, 0.0009765625
    %v388 = vmul.f32 %v372, 0.0009765625
    %v389 = vmul.f32 %v379, 0.0009765625
    %v390 = vmul.f32 %v386, 0.0009765625
    %v393 = vcombine.high %v350, %v350
    %v394 = vcombine.high %v351, %v351
    %v397 = vsel %vm358, %v350, 0.0
    %v398 = vrot.slane %v397, 4
    %v399 = vadd.f32 %v397, %v398
    %v400 = vrot.slane %v399, 2
    %v401 = vadd.f32 %v399, %v400
    %v402 = vrot.slane %v401, 1
    %v403 = vadd.f32 %v401, %v402
    %v404 = vsel %vm358, %v393, 0.0
    %v405 = vrot.slane %v404, 4
    %v406 = vadd.f32 %v404, %v405
    %v407 = vrot.slane %v406, 2
    %v408 = vadd.f32 %v406, %v407
    %v409 = vrot.slane %v408, 1
    %v410 = vadd.f32 %v408, %v409
    %v411 = vsel %vm358, %v351, 0.0
    %v412 = vrot.slane %v411, 4
    %v413 = vadd.f32 %v411, %v412
    %v414 = vrot.slane %v413, 2
    %v415 = vadd.f32 %v413, %v414
    %v416 = vrot.slane %v415, 1
    %v417 = vadd.f32 %v415, %v416
    %v418 = vsel %vm358, %v394, 0.0
    %v419 = vrot.slane %v418, 4
    %v420 = vadd.f32 %v418, %v419
    %v421 = vrot.slane %v420, 2
    %v422 = vadd.f32 %v420, %v421
    %v423 = vrot.slane %v422, 1
    %v424 = vadd.f32 %v422, %v423
    %v425 = vmul.f32 %v403, 0.0009765625
    %v426 = vmul.f32 %v410, 0.0009765625
    %v427 = vmul.f32 %v417, 0.0009765625
    %v428 = vmul.f32 %v424, 0.0009765625
    %v429 = vmul.f32 %v387, %v387
    %v430 = vmul.f32 %v388, %v388
    %v431 = vmul.f32 %v389, %v389
    %v432 = vmul.f32 %v390, %v390
    %v433 = vsub.f32 %v425, %v429
    %v434 = vsub.f32 %v426, %v430
    %v435 = vsub.f32 %v427, %v431
    %v436 = vsub.f32 %v428, %v432
    %v437 = vadd.f32 %v433, 1e-05
    %v438 = vadd.f32 %v434, 1e-05
    %v439 = vadd.f32 %v435, 1e-05
    %v440 = vadd.f32 %v436, 1e-05
    %v441 = vrsqrt.pop %v437
    %v442 = vrsqrt.pop %v438
    %v443 = vrsqrt.pop %v439
    %v444 = vrsqrt.pop %v440
    %v449 = vcombine.low %v441, %v442
    %v450 = vcombine.low %v443, %v444
    %v453 = vmul.f32 %v25, %v449
    %v454 = vmul.f32 %v26, %v450
    %455 = vrot.lane.b32.xlu0 %v22, 126
    %v456 = vpop.permute.xlu0 %455
    %v458 = vmul.f32 %v453, %v456
    %v459 = vmul.f32 %v454, %v456
    %v460 = vmul.f32 %v25, %v243
    %v461 = vmul.f32 %v26, %v250
    %v462 = vadd.f32 %v460, %v336
    %v463 = vadd.f32 %v461, %v336
    %v468 = vcombine.low %v387, %v388
    %v469 = vcombine.low %v389, %v390
    %v472 = vsub.f32 %v462, %v468
    %v473 = vsub.f32 %v463, %v469
    %v474 = vmul.f32 %v472, %v449
    %v475 = vmul.f32 %v473, %v450
    %v476 = vmul.f32 %v474, %v456
    %v477 = vmul.f32 %v475, %v456
    %478 = vrot.lane.b32.xlu0 %v22, 125
    %v479 = vpop.permute.xlu0 %478
    %v481 = vadd.f32 %v476, %v479
    %v482 = vadd.f32 %v477, %v479
    %484 = vset.pattern.permute.xlu0 0
    %485 = vperm.xlu0 %484, %v458
    %v486 = vpop.permute.xlu0 %485
    %489 = vset.pattern.permute.xlu0 0
    %490 = vperm.xlu0 %489, %v459
    %v491 = vpop.permute.xlu0 %490
    %v493 = vmul.f32 %v486, %v270
    %v494 = vmul.f32 %v486, %v276
    %v495 = vmul.f32 %v491, %v282
    %v496 = vmul.f32 %v491, %v288
    %498 = vset.pattern.permute.xlu0 0
    %499 = vperm.xlu0 %498, %v481
    %v500 = vpop.permute.xlu0 %499
    %503 = vset.pattern.permute.xlu0 0
    %504 = vperm.xlu0 %503, %v482
    %v505 = vpop.permute.xlu0 %504
    %v507 = vadd.f32 %v493, %v500
    %v508 = vadd.f32 %v494, %v500
    %v509 = vadd.f32 %v495, %v505
    %v510 = vadd.f32 %v496, %v505
    %v511 = vadd.f32 %v507, %v18
    %v512 = vadd.f32 %v508, %v19
    %v513 = vadd.f32 %v509, %v20
    %v514 = vadd.f32 %v510, %v21
    %515 = vst [vmem:[#allocation2] sm:$0xff] %v511
    %516 = vst [vmem:[#allocation2 + $0x8] sm:$0xff] %v512
    %517 = vst [vmem:[#allocation2 + $0x10] sm:$0xff] %v513
    %518 = vst [vmem:[#allocation2 + $0x18] sm:$0xff] %v514
    // Predicated region
    $region18: #{tpu_custom_call.1} parent=1 // pred_check
      _
    $region19: #{tpu_custom_call.1} parent=1 // pred_check_branch
      %520 = sbr.rel (0) target = $region21
    $region20: #{tpu_custom_call.1} parent=1 // pred_region
      %s522 = ssub.s32 512, 512
      %523 = vsyncadd [#allocation3], %s522
      %s524 = sshll.u32 [#allocation2], 4
      %s525 = int_to_ptr.vmem [resolvable:$true] %s524
      %530 = dma.vmem_to_hbm [thread:$0]  %s525, 512, %s4, [#allocation3], 256, 256, 16
    $region21: #{tpu_custom_call.1} parent=1 // pred_fallthru
      _
    // Predicated region
    $region22: #{tpu_custom_call.1} parent=1 // pred_check
      _
    $region23: #{tpu_custom_call.1} parent=1 // pred_check_branch
      %532 = sbr.rel (0) target = $region25
    $region24: #{tpu_custom_call.1} parent=1 // pred_region
      %533 = dma.done [#allocation3], 512
    $region25: #{tpu_custom_call.1} parent=1 // pred_fallthru
      _
    %534 = vsyncpa [#allocation3], 1

</llo_original>
